<compile_context>
chip_gen: v5e
topology: v5e:2x2
jax: 0.10.0
libtpu: 0.0.40
codegen_flags: <defaults>
</compile_context>

<pallas_src>
import functools

import jax
import jax.numpy as jnp
from jax.experimental import pallas as pl
from jax.experimental.pallas import tpu as pltpu


_MATMUL_WEIGHT_KEYS = {"wb1", "wb2", "wih", "whh", "wa1", "wa2", "wa3", "wa4", "wo"}
_BIAS_ORDER = ["bb1", "bb2", "blstm", "ba1", "ba2", "ba3", "ba4", "bo"]


def _round_up(v, m):
    return -(-v // m) * m


def _weight_layout(num_strains, hidden_dim, lstm_in):
    """Static row offsets of each bf16 matmul weight inside the packed slab.

    Each weight occupies rows [off, off+rows) and columns [0, cols) of a
    (total_rows, 4*hidden_dim) bf16 slab.  Row offsets are padded to multiples
    of 16 (bf16 sublane tiling) so every static slice starts tile-aligned.
    """
    N, H, Nin = num_strains, hidden_dim, lstm_in
    order = [
        ("wb1", N, H), ("wb2", H, Nin),
        ("wih", Nin, 4 * H), ("whh", H, 4 * H),
        ("wa1", H, H), ("wa2", H, H), ("wa3", H, H), ("wa4", H, H),
        ("wo", H, N),
    ]
    layout = {}
    off = 0
    for name, r, c in order:
        layout[name] = (off, r, c)
        off += _round_up(r, 16)
    return layout, off


def pack_params(params, num_strains, hidden_dim, lstm_in):
    """One-time packing: bf16 weight slab + f32 bias slab (out of the per-call path)."""
    N, H, Nin = num_strains, hidden_dim, lstm_in
    layout, total_rows = _weight_layout(N, H, Nin)
    C = 4 * H
    w_slab = jnp.zeros((total_rows, C), jnp.bfloat16)
    for name, (off, r, c) in layout.items():
        w_slab = w_slab.at[off:off + r, :c].set(params[name].astype(jnp.bfloat16))
    b_slab = jnp.zeros((len(_BIAS_ORDER), C), jnp.float32)
    for i, name in enumerate(_BIAS_ORDER):
        b = params[name]
        b_slab = b_slab.at[i, : b.shape[1]].set(b[0].astype(jnp.float32))
    return w_slab, b_slab


def _lstm_kernel(
    x_ref,        # (T*B, N)          f32
    w_ref,        # (Rtot, 4H)        bf16  packed matmul weights
    b_ref,        # (8, 4H)           f32   packed biases
    out_ref,      # (T*B, N)          f32
    *, seq_len, batch, num_strains, hidden_dim, lstm_in, layout,
):
    T, B, N, H, Nin = seq_len, batch, num_strains, hidden_dim, lstm_in
    bf16, f32 = jnp.bfloat16, jnp.float32

    def w(name):                                   # resident bf16 weight, static slice
        off, r, c = layout[name]
        return w_ref[off:off + r, :c]

    b_all = b_ref[...]                             # (8, 4H) f32, loaded once
    bb1, bb2 = b_all[0:1, :H], b_all[1:2, :Nin]
    blstm = b_all[2:3, :4 * H]
    ba1, ba2 = b_all[3:4, :H], b_all[4:5, :H]
    ba3, ba4 = b_all[5:6, :H], b_all[6:7, :H]
    bo = b_all[7:8, :N]

    def mm(a, wname):                              # bf16 MXU operands, f32 accumulation
        return jnp.dot(a.astype(bf16), w(wname), preferred_element_type=f32)

    # ---- before_lstm over all T*B rows at once (hoisted off the recurrent path) ----
    z = jnp.tanh(mm(x_ref[...], "wb1") + bb1)
    z = jnp.tanh(mm(z, "wb2") + bb2)               # (T*B, Nin)

    # ---- input-side gate projection for all timesteps; stays in registers (~2 vregs)
    gx = mm(z, "wih") + blstm                      # (T*B, 4H) f32

    whh = w("whh")                                 # resident bf16 recurrent weight

    # ---- serial LSTM recurrence (PyTorch gate order i, f, g, o) ----
    # T is small & static -> fully unrolled straight-line code; h/c and every h_t
    # stay in vregs — no VMEM scratch round-trips on the serial chain.
    h = jnp.zeros((B, H), f32)
    c = jnp.zeros((B, H), f32)
    hs = []
    for t in range(T):
        gates = gx[t * B:(t + 1) * B, :] + jnp.dot(
            h.astype(bf16), whh, preferred_element_type=f32)       # (B, 4H) f32
        sg = jax.nn.sigmoid(gates)                 # full 4H-wide EUP ops, slice after
        tg = jnp.tanh(gates)
        i_g, f_g = sg[:, 0:H], sg[:, H:2 * H]
        g_g, o_g = tg[:, 2 * H:3 * H], sg[:, 3 * H:4 * H]
        c = f_g * c + i_g * g_g
        h = o_g * jnp.tanh(c)
        hs.append(h)

    # ---- after_lstm over all T*B rows at once ----
    y = jnp.concatenate(hs, axis=0)                # (T*B, H) f32, in registers
    y = jnp.tanh(mm(y, "wa1") + ba1)
    y = jnp.tanh(mm(y, "wa2") + ba2)
    y = jnp.tanh(mm(y, "wa3") + ba3)
    y = jnp.tanh(mm(y, "wa4") + ba4)
    y = mm(y, "wo") + bo

    out_ref[...] = y.astype(out_ref.dtype)         # single store of the whole output


def lstm_forward(x, w_slab, b_slab, *, hidden_dim, lstm_in_size):
    """x: (T, B, N) float32.  Returns (B, N, T) like the PyTorch module."""
    T, B, N = x.shape
    H, Nin = hidden_dim, lstm_in_size
    layout, total_rows = _weight_layout(N, H, Nin)
    assert w_slab.shape == (total_rows, 4 * H), (w_slab.shape, total_rows, 4 * H)

    x2d = x.reshape(T * B, N)
    kernel = functools.partial(
        _lstm_kernel, seq_len=T, batch=B, num_strains=N,
        hidden_dim=H, lstm_in=Nin, layout=layout)

    out2d = pl.pallas_call(
        kernel,
        out_shape=jax.ShapeDtypeStruct((T * B, N), x.dtype),
        grid_spec=pltpu.PrefetchScalarGridSpec(
            num_scalar_prefetch=0,
            grid=(1,),                             # single step: recurrence is in-kernel
            in_specs=[
                pl.BlockSpec((T * B, N), lambda i: (0, 0)),
                pl.BlockSpec(w_slab.shape, lambda i: (0, 0)),
                pl.BlockSpec(b_slab.shape, lambda i: (0, 0)),
            ],
            out_specs=pl.BlockSpec((T * B, N), lambda i: (0, 0)),
        ),
        compiler_params=pltpu.CompilerParams(
            dimension_semantics=("arbitrary",),    # serial recurrence; no megacore split
        ),
    )(x2d, w_slab, b_slab)

    # (T*B, N) -> (T, B, N) -> (B, N, T)  == data.transpose(0,1).transpose(1,2)
    return jnp.transpose(out2d.reshape(T, B, N), (1, 2, 0))


def _reference_forward(x, params):
    """Pure-JAX reference with the same precision policy (bf16 matmul operands,
    f32 accumulation and f32 elementwise math)."""
    bf16 = jnp.bfloat16
    W = {k: (v.astype(bf16) if k in _MATMUL_WEIGHT_KEYS else v) for k, v in params.items()}

    def mm(a, w):
        return jnp.dot(a.astype(bf16), w, preferred_element_type=jnp.float32)

    def before(v):
        v = jnp.tanh(mm(v, W["wb1"]) + W["bb1"][0])
        return jnp.tanh(mm(v, W["wb2"]) + W["bb2"][0])

    def after(v):
        v = jnp.tanh(mm(v, W["wa1"]) + W["ba1"][0])
        v = jnp.tanh(mm(v, W["wa2"]) + W["ba2"][0])
        v = jnp.tanh(mm(v, W["wa3"]) + W["ba3"][0])
        v = jnp.tanh(mm(v, W["wa4"]) + W["ba4"][0])
        return mm(v, W["wo"]) + W["bo"][0]

    H = params["wa1"].shape[0]
    B = x.shape[1]

    def step(carry, x_t):
        h, c = carry
        z = before(x_t)
        gates = mm(z, W["wih"]) + mm(h, W["whh"]) + W["blstm"][0]
        i = jax.nn.sigmoid(gates[:, 0 * H:1 * H])
        f = jax.nn.sigmoid(gates[:, 1 * H:2 * H])
        g = jnp.tanh(gates[:, 2 * H:3 * H])
        o = jax.nn.sigmoid(gates[:, 3 * H:4 * H])
        c = f * c + i * g
        h = o * jnp.tanh(c)
        return (h, c), after(h)

    init = (jnp.zeros((B, H), jnp.float32), jnp.zeros((B, H), jnp.float32))
    _, ys = jax.lax.scan(step, init, x)            # ys: (T, B, N)
    return jnp.transpose(ys, (1, 2, 0))


def make_params(key, num_strains, hidden_dim, lstm_in_size):
    """Deterministic synthetic parameters (shapes match the PyTorch module)."""
    ks = jax.random.split(key, 17)
    u = lambda k, shape, scale: jax.random.uniform(k, shape, jnp.float32, -scale, scale)
    N, H, Nin = num_strains, hidden_dim, lstm_in_size
    return {
        # before_lstm
        "wb1": u(ks[0], (N, H), 1.0 / jnp.sqrt(N)),
        "bb1": u(ks[1], (1, H), 1.0 / jnp.sqrt(N)),
        "wb2": u(ks[2], (H, Nin), 1.0 / jnp.sqrt(H)),
        "bb2": u(ks[3], (1, Nin), 1.0 / jnp.sqrt(H)),
        # lstm (weights stored pre-transposed as (in, 4H); b_ih + b_hh folded together)
        "wih": u(ks[4], (Nin, 4 * H), 1.0 / jnp.sqrt(H)),
        "whh": u(ks[5], (H, 4 * H), 1.0 / jnp.sqrt(H)),
        "blstm": u(ks[6], (1, 4 * H), 1.0 / jnp.sqrt(H)),
        # after_lstm
        "wa1": u(ks[7], (H, H), 1.0 / jnp.sqrt(H)),
        "ba1": u(ks[8], (1, H), 1.0 / jnp.sqrt(H)),
        "wa2": u(ks[9], (H, H), 1.0 / jnp.sqrt(H)),
        "ba2": u(ks[10], (1, H), 1.0 / jnp.sqrt(H)),
        "wa3": u(ks[11], (H, H), 1.0 / jnp.sqrt(H)),
        "ba3": u(ks[12], (1, H), 1.0 / jnp.sqrt(H)),
        "wa4": u(ks[13], (H, H), 1.0 / jnp.sqrt(H)),
        "ba4": u(ks[14], (1, H), 1.0 / jnp.sqrt(H)),
        "wo": u(ks[15], (H, N), 1.0 / jnp.sqrt(H)),
        "bo": u(ks[16], (1, N), 1.0 / jnp.sqrt(H)),
    }


if __name__ == "__main__":
    SEQ, BATCH, NUM_STRAINS, HIDDEN = 8, 2, 4, 32
    LSTM_IN = NUM_STRAINS  # LSTM_in_size defaults to num_strains

    key = jax.random.PRNGKey(0)
    k_x, k_p = jax.random.split(key)
    x = jax.random.normal(k_x, (SEQ, BATCH, NUM_STRAINS), jnp.float32)
    params = make_params(k_p, NUM_STRAINS, HIDDEN, LSTM_IN)

    # One-time packing + bf16 cast (out of the per-call path).
    w_slab, b_slab = pack_params(params, NUM_STRAINS, HIDDEN, LSTM_IN)
    w_slab, b_slab = jax.block_until_ready((w_slab, b_slab))

    fwd = jax.jit(functools.partial(lstm_forward, hidden_dim=HIDDEN, lstm_in_size=LSTM_IN))
    y = jax.block_until_ready(fwd(x, w_slab, b_slab))
    assert y.shape == (BATCH, NUM_STRAINS, SEQ), y.shape

    y_ref = _reference_forward(x, params)
    err = float(jnp.max(jnp.abs(y - y_ref)))
    assert err < 2e-4, err

    print("KERNEL_OK")
</pallas_src>

<mosaic_0001>
module attributes {stable_mosaic.version = 11 : i64} {
  func.func @_lstm_kernel(%arg0: i32, %arg1: memref<16x4xf32, #tpu.memory_space<vmem>>, %arg2: memref<256x128xbf16, #tpu.memory_space<vmem>>, %arg3: memref<8x128xf32, #tpu.memory_space<vmem>>, %arg4: memref<16x4xf32, #tpu.memory_space<vmem>>) attributes {dimension_semantics = [#tpu.dimension_semantics<arbitrary>], iteration_bounds = array<i64: 1>, scalar_prefetch = 0 : i64, scratch_operands = 0 : i64, tpu.core_type = #tpu.core_type<tc>, window_params = [{pipeline_mode = #tpu.pipeline_mode<synchronous>, transform_indices = @transform_0, window_bounds = array<i64: 16, 4>}, {pipeline_mode = #tpu.pipeline_mode<synchronous>, transform_indices = @transform_1, window_bounds = array<i64: 256, 128>}, {pipeline_mode = #tpu.pipeline_mode<synchronous>, transform_indices = @transform_2, window_bounds = array<i64: 8, 128>}, {pipeline_mode = #tpu.pipeline_mode<synchronous>, transform_indices = @transform_3, window_bounds = array<i64: 16, 4>}]} {
    %c0 = arith.constant 0 : index
    %c0_0 = arith.constant 0 : index
    %0 = vector.load %arg3[%c0, %c0_0] : memref<8x128xf32, #tpu.memory_space<vmem>>, vector<8x128xf32>
    %1 = vector.extract_strided_slice %0 {offsets = [0, 0], sizes = [1, 32], strides = [1, 1]} : vector<8x128xf32> to vector<1x32xf32>
    %2 = vector.extract_strided_slice %0 {offsets = [1, 0], sizes = [1, 4], strides = [1, 1]} : vector<8x128xf32> to vector<1x4xf32>
    %3 = vector.extract_strided_slice %0 {offsets = [2, 0], sizes = [1, 128], strides = [1, 1]} : vector<8x128xf32> to vector<1x128xf32>
    %4 = vector.extract_strided_slice %0 {offsets = [3, 0], sizes = [1, 32], strides = [1, 1]} : vector<8x128xf32> to vector<1x32xf32>
    %5 = vector.extract_strided_slice %0 {offsets = [4, 0], sizes = [1, 32], strides = [1, 1]} : vector<8x128xf32> to vector<1x32xf32>
    %6 = vector.extract_strided_slice %0 {offsets = [5, 0], sizes = [1, 32], strides = [1, 1]} : vector<8x128xf32> to vector<1x32xf32>
    %7 = vector.extract_strided_slice %0 {offsets = [6, 0], sizes = [1, 32], strides = [1, 1]} : vector<8x128xf32> to vector<1x32xf32>
    %8 = vector.extract_strided_slice %0 {offsets = [7, 0], sizes = [1, 4], strides = [1, 1]} : vector<8x128xf32> to vector<1x4xf32>
    %c0_1 = arith.constant 0 : index
    %c0_2 = arith.constant 0 : index
    %9 = vector.load %arg1[%c0_1, %c0_2] : memref<16x4xf32, #tpu.memory_space<vmem>>, vector<16x4xf32>
    %10 = arith.truncf %9 : vector<16x4xf32> to vector<16x4xbf16>
    %c0_3 = arith.constant 0 : index
    %c0_4 = arith.constant 0 : index
    %11 = vector.load %arg2[%c0_3, %c0_4] : memref<256x128xbf16, #tpu.memory_space<vmem>>, vector<4x32xbf16>
    %cst = arith.constant dense<0.000000e+00> : vector<16x32xf32>
    %12 = tpu.matmul %10, %11, %cst {dimension_numbers = #tpu.dot_dimension_numbers<[1], [0], [0], [1], [0, 0, 1, 1], [], []>} : vector<16x4xbf16>, vector<4x32xbf16>, vector<16x32xf32> -> vector<16x32xf32>
    %13 = vector.broadcast %1 : vector<1x32xf32> to vector<16x32xf32>
    %14 = arith.addf %12, %13 : vector<16x32xf32>
    %15 = math.tanh %14 : vector<16x32xf32>
    %16 = arith.truncf %15 : vector<16x32xf32> to vector<16x32xbf16>
    %c16 = arith.constant 16 : index
    %c0_5 = arith.constant 0 : index
    %17 = vector.load %arg2[%c16, %c0_5] : memref<256x128xbf16, #tpu.memory_space<vmem>>, vector<32x4xbf16>
    %cst_6 = arith.constant dense<0.000000e+00> : vector<16x4xf32>
    %18 = tpu.matmul %16, %17, %cst_6 {dimension_numbers = #tpu.dot_dimension_numbers<[1], [0], [0], [1], [0, 0, 1, 1], [], []>} : vector<16x32xbf16>, vector<32x4xbf16>, vector<16x4xf32> -> vector<16x4xf32>
    %19 = vector.broadcast %2 : vector<1x4xf32> to vector<16x4xf32>
    %20 = arith.addf %18, %19 : vector<16x4xf32>
    %21 = math.tanh %20 : vector<16x4xf32>
    %22 = arith.truncf %21 : vector<16x4xf32> to vector<16x4xbf16>
    %c48 = arith.constant 48 : index
    %c0_7 = arith.constant 0 : index
    %23 = vector.load %arg2[%c48, %c0_7] : memref<256x128xbf16, #tpu.memory_space<vmem>>, vector<4x128xbf16>
    %cst_8 = arith.constant dense<0.000000e+00> : vector<16x128xf32>
    %24 = tpu.matmul %22, %23, %cst_8 {dimension_numbers = #tpu.dot_dimension_numbers<[1], [0], [0], [1], [0, 0, 1, 1], [], []>} : vector<16x4xbf16>, vector<4x128xbf16>, vector<16x128xf32> -> vector<16x128xf32>
    %25 = vector.broadcast %3 : vector<1x128xf32> to vector<16x128xf32>
    %26 = arith.addf %24, %25 : vector<16x128xf32>
    %c64 = arith.constant 64 : index
    %c0_9 = arith.constant 0 : index
    %27 = vector.load %arg2[%c64, %c0_9] : memref<256x128xbf16, #tpu.memory_space<vmem>>, vector<32x128xbf16>
    %cst_10 = arith.constant 0.000000e+00 : f32
    %28 = vector.broadcast %cst_10 : f32 to vector<2x32xf32>
    %cst_11 = arith.constant 0.000000e+00 : f32
    %29 = vector.broadcast %cst_11 : f32 to vector<2x32xf32>
    %30 = vector.extract_strided_slice %26 {offsets = [0, 0], sizes = [2, 128], strides = [1, 1]} : vector<16x128xf32> to vector<2x128xf32>
    %31 = arith.truncf %28 : vector<2x32xf32> to vector<2x32xbf16>
    %cst_12 = arith.constant dense<0.000000e+00> : vector<2x128xf32>
    %32 = tpu.matmul %31, %27, %cst_12 {dimension_numbers = #tpu.dot_dimension_numbers<[1], [0], [0], [1], [0, 0, 1, 1], [], []>} : vector<2x32xbf16>, vector<32x128xbf16>, vector<2x128xf32> -> vector<2x128xf32>
    %33 = arith.addf %30, %32 : vector<2x128xf32>
    %34 = arith.negf %33 : vector<2x128xf32>
    %35 = math.exp %34 : vector<2x128xf32>
    %cst_13 = arith.constant 1.000000e+00 : f32
    %36 = vector.broadcast %cst_13 : f32 to vector<2x128xf32>
    %37 = arith.addf %36, %35 : vector<2x128xf32>
    %38 = arith.divf %36, %37 : vector<2x128xf32>
    %39 = math.tanh %33 : vector<2x128xf32>
    %40 = vector.extract_strided_slice %38 {offsets = [0, 0], sizes = [2, 32], strides = [1, 1]} : vector<2x128xf32> to vector<2x32xf32>
    %41 = vector.extract_strided_slice %38 {offsets = [0, 32], sizes = [2, 32], strides = [1, 1]} : vector<2x128xf32> to vector<2x32xf32>
    %42 = vector.extract_strided_slice %39 {offsets = [0, 64], sizes = [2, 32], strides = [1, 1]} : vector<2x128xf32> to vector<2x32xf32>
    %43 = vector.extract_strided_slice %38 {offsets = [0, 96], sizes = [2, 32], strides = [1, 1]} : vector<2x128xf32> to vector<2x32xf32>
    %44 = arith.mulf %41, %29 : vector<2x32xf32>
    %45 = arith.mulf %40, %42 : vector<2x32xf32>
    %46 = arith.addf %44, %45 : vector<2x32xf32>
    %47 = math.tanh %46 : vector<2x32xf32>
    %48 = arith.mulf %43, %47 : vector<2x32xf32>
    %49 = vector.extract_strided_slice %26 {offsets = [2, 0], sizes = [2, 128], strides = [1, 1]} : vector<16x128xf32> to vector<2x128xf32>
    %50 = arith.truncf %48 : vector<2x32xf32> to vector<2x32xbf16>
    %cst_14 = arith.constant dense<0.000000e+00> : vector<2x128xf32>
    %51 = tpu.matmul %50, %27, %cst_14 {dimension_numbers = #tpu.dot_dimension_numbers<[1], [0], [0], [1], [0, 0, 1, 1], [], []>} : vector<2x32xbf16>, vector<32x128xbf16>, vector<2x128xf32> -> vector<2x128xf32>
    %52 = arith.addf %49, %51 : vector<2x128xf32>
    %53 = arith.negf %52 : vector<2x128xf32>
    %54 = math.exp %53 : vector<2x128xf32>
    %cst_15 = arith.constant 1.000000e+00 : f32
    %55 = vector.broadcast %cst_15 : f32 to vector<2x128xf32>
    %56 = arith.addf %55, %54 : vector<2x128xf32>
    %57 = arith.divf %55, %56 : vector<2x128xf32>
    %58 = math.tanh %52 : vector<2x128xf32>
    %59 = vector.extract_strided_slice %57 {offsets = [0, 0], sizes = [2, 32], strides = [1, 1]} : vector<2x128xf32> to vector<2x32xf32>
    %60 = vector.extract_strided_slice %57 {offsets = [0, 32], sizes = [2, 32], strides = [1, 1]} : vector<2x128xf32> to vector<2x32xf32>
    %61 = vector.extract_strided_slice %58 {offsets = [0, 64], sizes = [2, 32], strides = [1, 1]} : vector<2x128xf32> to vector<2x32xf32>
    %62 = vector.extract_strided_slice %57 {offsets = [0, 96], sizes = [2, 32], strides = [1, 1]} : vector<2x128xf32> to vector<2x32xf32>
    %63 = arith.mulf %60, %46 : vector<2x32xf32>
    %64 = arith.mulf %59, %61 : vector<2x32xf32>
    %65 = arith.addf %63, %64 : vector<2x32xf32>
    %66 = math.tanh %65 : vector<2x32xf32>
    %67 = arith.mulf %62, %66 : vector<2x32xf32>
    %68 = vector.extract_strided_slice %26 {offsets = [4, 0], sizes = [2, 128], strides = [1, 1]} : vector<16x128xf32> to vector<2x128xf32>
    %69 = arith.truncf %67 : vector<2x32xf32> to vector<2x32xbf16>
    %cst_16 = arith.constant dense<0.000000e+00> : vector<2x128xf32>
    %70 = tpu.matmul %69, %27, %cst_16 {dimension_numbers = #tpu.dot_dimension_numbers<[1], [0], [0], [1], [0, 0, 1, 1], [], []>} : vector<2x32xbf16>, vector<32x128xbf16>, vector<2x128xf32> -> vector<2x128xf32>
    %71 = arith.addf %68, %70 : vector<2x128xf32>
    %72 = arith.negf %71 : vector<2x128xf32>
    %73 = math.exp %72 : vector<2x128xf32>
    %cst_17 = arith.constant 1.000000e+00 : f32
    %74 = vector.broadcast %cst_17 : f32 to vector<2x128xf32>
    %75 = arith.addf %74, %73 : vector<2x128xf32>
    %76 = arith.divf %74, %75 : vector<2x128xf32>
    %77 = math.tanh %71 : vector<2x128xf32>
    %78 = vector.extract_strided_slice %76 {offsets = [0, 0], sizes = [2, 32], strides = [1, 1]} : vector<2x128xf32> to vector<2x32xf32>
    %79 = vector.extract_strided_slice %76 {offsets = [0, 32], sizes = [2, 32], strides = [1, 1]} : vector<2x128xf32> to vector<2x32xf32>
    %80 = vector.extract_strided_slice %77 {offsets = [0, 64], sizes = [2, 32], strides = [1, 1]} : vector<2x128xf32> to vector<2x32xf32>
    %81 = vector.extract_strided_slice %76 {offsets = [0, 96], sizes = [2, 32], strides = [1, 1]} : vector<2x128xf32> to vector<2x32xf32>
    %82 = arith.mulf %79, %65 : vector<2x32xf32>
    %83 = arith.mulf %78, %80 : vector<2x32xf32>
    %84 = arith.addf %82, %83 : vector<2x32xf32>
    %85 = math.tanh %84 : vector<2x32xf32>
    %86 = arith.mulf %81, %85 : vector<2x32xf32>
    %87 = vector.extract_strided_slice %26 {offsets = [6, 0], sizes = [2, 128], strides = [1, 1]} : vector<16x128xf32> to vector<2x128xf32>
    %88 = arith.truncf %86 : vector<2x32xf32> to vector<2x32xbf16>
    %cst_18 = arith.constant dense<0.000000e+00> : vector<2x128xf32>
    %89 = tpu.matmul %88, %27, %cst_18 {dimension_numbers = #tpu.dot_dimension_numbers<[1], [0], [0], [1], [0, 0, 1, 1], [], []>} : vector<2x32xbf16>, vector<32x128xbf16>, vector<2x128xf32> -> vector<2x128xf32>
    %90 = arith.addf %87, %89 : vector<2x128xf32>
    %91 = arith.negf %90 : vector<2x128xf32>
    %92 = math.exp %91 : vector<2x128xf32>
    %cst_19 = arith.constant 1.000000e+00 : f32
    %93 = vector.broadcast %cst_19 : f32 to vector<2x128xf32>
    %94 = arith.addf %93, %92 : vector<2x128xf32>
    %95 = arith.divf %93, %94 : vector<2x128xf32>
    %96 = math.tanh %90 : vector<2x128xf32>
    %97 = vector.extract_strided_slice %95 {offsets = [0, 0], sizes = [2, 32], strides = [1, 1]} : vector<2x128xf32> to vector<2x32xf32>
    %98 = vector.extract_strided_slice %95 {offsets = [0, 32], sizes = [2, 32], strides = [1, 1]} : vector<2x128xf32> to vector<2x32xf32>
    %99 = vector.extract_strided_slice %96 {offsets = [0, 64], sizes = [2, 32], strides = [1, 1]} : vector<2x128xf32> to vector<2x32xf32>
    %100 = vector.extract_strided_slice %95 {offsets = [0, 96], sizes = [2, 32], strides = [1, 1]} : vector<2x128xf32> to vector<2x32xf32>
    %101 = arith.mulf %98, %84 : vector<2x32xf32>
    %102 = arith.mulf %97, %99 : vector<2x32xf32>
    %103 = arith.addf %101, %102 : vector<2x32xf32>
    %104 = math.tanh %103 : vector<2x32xf32>
    %105 = arith.mulf %100, %104 : vector<2x32xf32>
    %106 = vector.extract_strided_slice %26 {offsets = [8, 0], sizes = [2, 128], strides = [1, 1]} : vector<16x128xf32> to vector<2x128xf32>
    %107 = arith.truncf %105 : vector<2x32xf32> to vector<2x32xbf16>
    %cst_20 = arith.constant dense<0.000000e+00> : vector<2x128xf32>
    %108 = tpu.matmul %107, %27, %cst_20 {dimension_numbers = #tpu.dot_dimension_numbers<[1], [0], [0], [1], [0, 0, 1, 1], [], []>} : vector<2x32xbf16>, vector<32x128xbf16>, vector<2x128xf32> -> vector<2x128xf32>
    %109 = arith.addf %106, %108 : vector<2x128xf32>
    %110 = arith.negf %109 : vector<2x128xf32>
    %111 = math.exp %110 : vector<2x128xf32>
    %cst_21 = arith.constant 1.000000e+00 : f32
    %112 = vector.broadcast %cst_21 : f32 to vector<2x128xf32>
    %113 = arith.addf %112, %111 : vector<2x128xf32>
    %114 = arith.divf %112, %113 : vector<2x128xf32>
    %115 = math.tanh %109 : vector<2x128xf32>
    %116 = vector.extract_strided_slice %114 {offsets = [0, 0], sizes = [2, 32], strides = [1, 1]} : vector<2x128xf32> to vector<2x32xf32>
    %117 = vector.extract_strided_slice %114 {offsets = [0, 32], sizes = [2, 32], strides = [1, 1]} : vector<2x128xf32> to vector<2x32xf32>
    %118 = vector.extract_strided_slice %115 {offsets = [0, 64], sizes = [2, 32], strides = [1, 1]} : vector<2x128xf32> to vector<2x32xf32>
    %119 = vector.extract_strided_slice %114 {offsets = [0, 96], sizes = [2, 32], strides = [1, 1]} : vector<2x128xf32> to vector<2x32xf32>
    %120 = arith.mulf %117, %103 : vector<2x32xf32>
    %121 = arith.mulf %116, %118 : vector<2x32xf32>
    %122 = arith.addf %120, %121 : vector<2x32xf32>
    %123 = math.tanh %122 : vector<2x32xf32>
    %124 = arith.mulf %119, %123 : vector<2x32xf32>
    %125 = vector.extract_strided_slice %26 {offsets = [10, 0], sizes = [2, 128], strides = [1, 1]} : vector<16x128xf32> to vector<2x128xf32>
    %126 = arith.truncf %124 : vector<2x32xf32> to vector<2x32xbf16>
    %cst_22 = arith.constant dense<0.000000e+00> : vector<2x128xf32>
    %127 = tpu.matmul %126, %27, %cst_22 {dimension_numbers = #tpu.dot_dimension_numbers<[1], [0], [0], [1], [0, 0, 1, 1], [], []>} : vector<2x32xbf16>, vector<32x128xbf16>, vector<2x128xf32> -> vector<2x128xf32>
    %128 = arith.addf %125, %127 : vector<2x128xf32>
    %129 = arith.negf %128 : vector<2x128xf32>
    %130 = math.exp %129 : vector<2x128xf32>
    %cst_23 = arith.constant 1.000000e+00 : f32
    %131 = vector.broadcast %cst_23 : f32 to vector<2x128xf32>
    %132 = arith.addf %131, %130 : vector<2x128xf32>
    %133 = arith.divf %131, %132 : vector<2x128xf32>
    %134 = math.tanh %128 : vector<2x128xf32>
    %135 = vector.extract_strided_slice %133 {offsets = [0, 0], sizes = [2, 32], strides = [1, 1]} : vector<2x128xf32> to vector<2x32xf32>
    %136 = vector.extract_strided_slice %133 {offsets = [0, 32], sizes = [2, 32], strides = [1, 1]} : vector<2x128xf32> to vector<2x32xf32>
    %137 = vector.extract_strided_slice %134 {offsets = [0, 64], sizes = [2, 32], strides = [1, 1]} : vector<2x128xf32> to vector<2x32xf32>
    %138 = vector.extract_strided_slice %133 {offsets = [0, 96], sizes = [2, 32], strides = [1, 1]} : vector<2x128xf32> to vector<2x32xf32>
    %139 = arith.mulf %136, %122 : vector<2x32xf32>
    %140 = arith.mulf %135, %137 : vector<2x32xf32>
    %141 = arith.addf %139, %140 : vector<2x32xf32>
    %142 = math.tanh %141 : vector<2x32xf32>
    %143 = arith.mulf %138, %142 : vector<2x32xf32>
    %144 = vector.extract_strided_slice %26 {offsets = [12, 0], sizes = [2, 128], strides = [1, 1]} : vector<16x128xf32> to vector<2x128xf32>
    %145 = arith.truncf %143 : vector<2x32xf32> to vector<2x32xbf16>
    %cst_24 = arith.constant dense<0.000000e+00> : vector<2x128xf32>
    %146 = tpu.matmul %145, %27, %cst_24 {dimension_numbers = #tpu.dot_dimension_numbers<[1], [0], [0], [1], [0, 0, 1, 1], [], []>} : vector<2x32xbf16>, vector<32x128xbf16>, vector<2x128xf32> -> vector<2x128xf32>
    %147 = arith.addf %144, %146 : vector<2x128xf32>
    %148 = arith.negf %147 : vector<2x128xf32>
    %149 = math.exp %148 : vector<2x128xf32>
    %cst_25 = arith.constant 1.000000e+00 : f32
    %150 = vector.broadcast %cst_25 : f32 to vector<2x128xf32>
    %151 = arith.addf %150, %149 : vector<2x128xf32>
    %152 = arith.divf %150, %151 : vector<2x128xf32>
    %153 = math.tanh %147 : vector<2x128xf32>
    %154 = vector.extract_strided_slice %152 {offsets = [0, 0], sizes = [2, 32], strides = [1, 1]} : vector<2x128xf32> to vector<2x32xf32>
    %155 = vector.extract_strided_slice %152 {offsets = [0, 32], sizes = [2, 32], strides = [1, 1]} : vector<2x128xf32> to vector<2x32xf32>
    %156 = vector.extract_strided_slice %153 {offsets = [0, 64], sizes = [2, 32], strides = [1, 1]} : vector<2x128xf32> to vector<2x32xf32>
    %157 = vector.extract_strided_slice %152 {offsets = [0, 96], sizes = [2, 32], strides = [1, 1]} : vector<2x128xf32> to vector<2x32xf32>
    %158 = arith.mulf %155, %141 : vector<2x32xf32>
    %159 = arith.mulf %154, %156 : vector<2x32xf32>
    %160 = arith.addf %158, %159 : vector<2x32xf32>
    %161 = math.tanh %160 : vector<2x32xf32>
    %162 = arith.mulf %157, %161 : vector<2x32xf32>
    %163 = vector.extract_strided_slice %26 {offsets = [14, 0], sizes = [2, 128], strides = [1, 1]} : vector<16x128xf32> to vector<2x128xf32>
    %164 = arith.truncf %162 : vector<2x32xf32> to vector<2x32xbf16>
    %cst_26 = arith.constant dense<0.000000e+00> : vector<2x128xf32>
    %165 = tpu.matmul %164, %27, %cst_26 {dimension_numbers = #tpu.dot_dimension_numbers<[1], [0], [0], [1], [0, 0, 1, 1], [], []>} : vector<2x32xbf16>, vector<32x128xbf16>, vector<2x128xf32> -> vector<2x128xf32>
    %166 = arith.addf %163, %165 : vector<2x128xf32>
    %167 = arith.negf %166 : vector<2x128xf32>
    %168 = math.exp %167 : vector<2x128xf32>
    %cst_27 = arith.constant 1.000000e+00 : f32
    %169 = vector.broadcast %cst_27 : f32 to vector<2x128xf32>
    %170 = arith.addf %169, %168 : vector<2x128xf32>
    %171 = arith.divf %169, %170 : vector<2x128xf32>
    %172 = math.tanh %166 : vector<2x128xf32>
    %173 = vector.extract_strided_slice %171 {offsets = [0, 0], sizes = [2, 32], strides = [1, 1]} : vector<2x128xf32> to vector<2x32xf32>
    %174 = vector.extract_strided_slice %171 {offsets = [0, 32], sizes = [2, 32], strides = [1, 1]} : vector<2x128xf32> to vector<2x32xf32>
    %175 = vector.extract_strided_slice %172 {offsets = [0, 64], sizes = [2, 32], strides = [1, 1]} : vector<2x128xf32> to vector<2x32xf32>
    %176 = vector.extract_strided_slice %171 {offsets = [0, 96], sizes = [2, 32], strides = [1, 1]} : vector<2x128xf32> to vector<2x32xf32>
    %177 = arith.mulf %174, %160 : vector<2x32xf32>
    %178 = arith.mulf %173, %175 : vector<2x32xf32>
    %179 = arith.addf %177, %178 : vector<2x32xf32>
    %180 = math.tanh %179 : vector<2x32xf32>
    %181 = arith.mulf %176, %180 : vector<2x32xf32>
    %182 = tpu.concatenate %48, %67, %86, %105, %124, %143, %162, %181 in 0 : vector<2x32xf32>, vector<2x32xf32>, vector<2x32xf32>, vector<2x32xf32>, vector<2x32xf32>, vector<2x32xf32>, vector<2x32xf32>, vector<2x32xf32> -> vector<16x32xf32>
    %183 = arith.truncf %182 : vector<16x32xf32> to vector<16x32xbf16>
    %c96 = arith.constant 96 : index
    %c0_28 = arith.constant 0 : index
    %184 = vector.load %arg2[%c96, %c0_28] : memref<256x128xbf16, #tpu.memory_space<vmem>>, vector<32x32xbf16>
    %cst_29 = arith.constant dense<0.000000e+00> : vector<16x32xf32>
    %185 = tpu.matmul %183, %184, %cst_29 {dimension_numbers = #tpu.dot_dimension_numbers<[1], [0], [0], [1], [0, 0, 1, 1], [], []>} : vector<16x32xbf16>, vector<32x32xbf16>, vector<16x32xf32> -> vector<16x32xf32>
    %186 = vector.broadcast %4 : vector<1x32xf32> to vector<16x32xf32>
    %187 = arith.addf %185, %186 : vector<16x32xf32>
    %188 = math.tanh %187 : vector<16x32xf32>
    %189 = arith.truncf %188 : vector<16x32xf32> to vector<16x32xbf16>
    %c128 = arith.constant 128 : index
    %c0_30 = arith.constant 0 : index
    %190 = vector.load %arg2[%c128, %c0_30] : memref<256x128xbf16, #tpu.memory_space<vmem>>, vector<32x32xbf16>
    %cst_31 = arith.constant dense<0.000000e+00> : vector<16x32xf32>
    %191 = tpu.matmul %189, %190, %cst_31 {dimension_numbers = #tpu.dot_dimension_numbers<[1], [0], [0], [1], [0, 0, 1, 1], [], []>} : vector<16x32xbf16>, vector<32x32xbf16>, vector<16x32xf32> -> vector<16x32xf32>
    %192 = vector.broadcast %5 : vector<1x32xf32> to vector<16x32xf32>
    %193 = arith.addf %191, %192 : vector<16x32xf32>
    %194 = math.tanh %193 : vector<16x32xf32>
    %195 = arith.truncf %194 : vector<16x32xf32> to vector<16x32xbf16>
    %c160 = arith.constant 160 : index
    %c0_32 = arith.constant 0 : index
    %196 = vector.load %arg2[%c160, %c0_32] : memref<256x128xbf16, #tpu.memory_space<vmem>>, vector<32x32xbf16>
    %cst_33 = arith.constant dense<0.000000e+00> : vector<16x32xf32>
    %197 = tpu.matmul %195, %196, %cst_33 {dimension_numbers = #tpu.dot_dimension_numbers<[1], [0], [0], [1], [0, 0, 1, 1], [], []>} : vector<16x32xbf16>, vector<32x32xbf16>, vector<16x32xf32> -> vector<16x32xf32>
    %198 = vector.broadcast %6 : vector<1x32xf32> to vector<16x32xf32>
    %199 = arith.addf %197, %198 : vector<16x32xf32>
    %200 = math.tanh %199 : vector<16x32xf32>
    %201 = arith.truncf %200 : vector<16x32xf32> to vector<16x32xbf16>
    %c192 = arith.constant 192 : index
    %c0_34 = arith.constant 0 : index
    %202 = vector.load %arg2[%c192, %c0_34] : memref<256x128xbf16, #tpu.memory_space<vmem>>, vector<32x32xbf16>
    %cst_35 = arith.constant dense<0.000000e+00> : vector<16x32xf32>
    %203 = tpu.matmul %201, %202, %cst_35 {dimension_numbers = #tpu.dot_dimension_numbers<[1], [0], [0], [1], [0, 0, 1, 1], [], []>} : vector<16x32xbf16>, vector<32x32xbf16>, vector<16x32xf32> -> vector<16x32xf32>
    %204 = vector.broadcast %7 : vector<1x32xf32> to vector<16x32xf32>
    %205 = arith.addf %203, %204 : vector<16x32xf32>
    %206 = math.tanh %205 : vector<16x32xf32>
    %207 = arith.truncf %206 : vector<16x32xf32> to vector<16x32xbf16>
    %c224 = arith.constant 224 : index
    %c0_36 = arith.constant 0 : index
    %208 = vector.load %arg2[%c224, %c0_36] : memref<256x128xbf16, #tpu.memory_space<vmem>>, vector<32x4xbf16>
    %cst_37 = arith.constant dense<0.000000e+00> : vector<16x4xf32>
    %209 = tpu.matmul %207, %208, %cst_37 {dimension_numbers = #tpu.dot_dimension_numbers<[1], [0], [0], [1], [0, 0, 1, 1], [], []>} : vector<16x32xbf16>, vector<32x4xbf16>, vector<16x4xf32> -> vector<16x4xf32>
    %210 = vector.broadcast %8 : vector<1x4xf32> to vector<16x4xf32>
    %211 = arith.addf %209, %210 : vector<16x4xf32>
    %c0_38 = arith.constant 0 : index
    %c0_39 = arith.constant 0 : index
    %212 = vector.load %arg4[%c0_38, %c0_39] : memref<16x4xf32, #tpu.memory_space<vmem>>, vector<16x4xf32>
    tpu.vector_store %arg4[%c0_38, %c0_39], %211 {strides = array<i32>} : memref<16x4xf32, #tpu.memory_space<vmem>>, vector<16x4xf32>,
    return
  }
  func.func @transform_0(%arg0: i32) -> (i32, i32) {
    %c0_i32 = arith.constant 0 : i32
    %c0_i32_0 = arith.constant 0 : i32
    %c0_i32_1 = arith.constant 0 : i32
    return %c0_i32, %c0_i32_0 : i32, i32
  }
  func.func @transform_1(%arg0: i32) -> (i32, i32) {
    %c0_i32 = arith.constant 0 : i32
    %c0_i32_0 = arith.constant 0 : i32
    %c0_i32_1 = arith.constant 0 : i32
    return %c0_i32, %c0_i32_0 : i32, i32
  }
  func.func @transform_2(%arg0: i32) -> (i32, i32) {
    %c0_i32 = arith.constant 0 : i32
    %c0_i32_0 = arith.constant 0 : i32
    %c0_i32_1 = arith.constant 0 : i32
    return %c0_i32, %c0_i32_0 : i32, i32
  }
  func.func @transform_3(%arg0: i32) -> (i32, i32) {
    %c0_i32 = arith.constant 0 : i32
    %c0_i32_0 = arith.constant 0 : i32
    %c0_i32_1 = arith.constant 0 : i32
    return %c0_i32, %c0_i32_0 : i32, i32
  }
}

</mosaic_0001>

<llo_original>
// kernel: lstm_forward.1
$region0: #{lstm_forward.1}
  #allocation0 [shape = 'u32[]', space=smem, size = 0x4, offset = 0x4, fixed_abs, tag = 'smem constant byte address 0x4 - core index']
  #allocation1 [shape = 'u32[72,128]{1,0:T(1,128)}', space=vmem, size = 0x9000, scoped, tag = 'internal scratch']
  %s0 = inlined_call_operand.vmem [shape: f32[16,4], index: 0, kind: input, shape index: {}]
  %s1 = inlined_call_operand.hbm [shape: bf16[256,128], index: 1, kind: input, shape index: {}]
  %s2 = inlined_call_operand.vmem [shape: f32[8,128], index: 2, kind: input, shape index: {}]
  %s3 = inlined_call_operand.vmem [shape: f32[16,4], index: 3, kind: output, shape index: {}]
  %s4 = sld [smem:[#allocation0]]
  $region26: #{lstm_forward.1} parent=0
    _
  %s6 = ssub.s32 1, %s4
  %s7 = scalar_select 0, %s6, %s4
  $region1: #{lstm_forward.1} parent=0
    #allocation2 [shape = 'u8[65536]{0}', space=vmem, size = 0x10000, scoped, tag = 'input window, operand 1, single buffered']
    #allocation3 [shape = 's32[1]{0}', space=sflag, size = 0x4, scoped, tag = 'scoped memory for lstm_forward.1']
    %8 = vsyncpa [#allocation3], 0
    // Predicated region
    $region2: #{lstm_forward.1} parent=1 // pred_check
      _
    $region3: #{lstm_forward.1} parent=1 // pred_check_branch
      %10 = sbr.rel (0) target = $region5
    $region4: #{lstm_forward.1} parent=1 // pred_region
      _
    $region5: #{lstm_forward.1} parent=1 // pred_fallthru
      _
    // Predicated region
    $region6: #{lstm_forward.1} parent=1 // pred_check
      _
    $region7: #{lstm_forward.1} parent=1 // pred_check_branch
      %12 = sbr.rel (0) target = $region9
    $region8: #{lstm_forward.1} parent=1 // pred_region
      %14 = vsyncadd [#allocation3], 0
      %s15 = sshll.u32 %s1, 4
      %s16 = int_to_ptr.hbm [resolvable:$true] %s15
      %s17 = sshll.u32 [#allocation2], 4
      %s18 = int_to_ptr.vmem [resolvable:$true] %s17
      %23 = dma.hbm_to_vmem [thread:$0]  %s16, 2048, %s18, [#allocation3], 64, 64, 4
    $region9: #{lstm_forward.1} parent=1 // pred_fallthru
      _
    // Predicated region
    $region10: #{lstm_forward.1} parent=1 // pred_check
      _
    $region11: #{lstm_forward.1} parent=1 // pred_check_branch
      %25 = sbr.rel (0) target = $region13
    $region12: #{lstm_forward.1} parent=1 // pred_region
      _
    $region13: #{lstm_forward.1} parent=1 // pred_fallthru
      _
    // Predicated region
    $region14: #{lstm_forward.1} parent=1 // pred_check
      _
    $region15: #{lstm_forward.1} parent=1 // pred_check_branch
      %27 = sbr.rel (0) target = $region17
    $region16: #{lstm_forward.1} parent=1 // pred_region
      %29 = dma.done [#allocation3], 2048
    $region17: #{lstm_forward.1} parent=1 // pred_fallthru
      _
    %v31 = vld [vmem:[%s2] sm:$0xff]
    %v32 = vld [vmem:[%s0] sm:$0xff]
    %v33 = vld [vmem:[%s0 + $0x8] sm:$0xff]
    %v34 = vpack.c.bf16 %v33, %v32
    %v35 = vld [vmem:[#allocation2] sm:$0x3]
    %v36 = vperm.slane %v31, 0
    %vm37 = vcmask 31744
    %v39 = vsel %vm37, %v34, 0
    %vm41 = vcmask 1041408
    %v43 = vsel %vm41, %v35, 0
    %45 = vmatpush.bf16.msra.mxu0 0
    %46 = vmatpush.bf16.msra.mxu0 0
    %47 = vmatpush.bf16.msra.mxu0 0
    %48 = vmatpush.bf16.msra.mxu0 0
    %49 = vmatpush.bf16.msra.mxu0 0
    %50 = vmatpush.bf16.msra.mxu0 0
    %51 = vmatpush.bf16.msra.mxu0 0
    %52 = vmatpush.bf16.msra.mxu0 %v43
    %53 = vmatmul.bf16.gmra.mxu0 %v39
    %v54 = vpop.f32.mrf.mxu0
    %v55 = vadd.f32 %v36, %v54
    %v56 = vpop.f32.mrf.mxu0
    %v57 = vadd.f32 %v36, %v56
    %58 = vdwg.mxu0
    %v59 = vtanh.pop %v55
    %v60 = vtanh.pop %v57
    %v61 = vpack.c.bf16 %v60, %v59
    %v62 = vld [vmem:[#allocation2 + $0x8] sm:$0xf]
    %v63 = vld [vmem:[#allocation2 + $0xc] sm:$0xf]
    %v64 = vld [vmem:[#allocation2 + $0x10] sm:$0xf]
    %v65 = vld [vmem:[#allocation2 + $0x14] sm:$0xf]
    %v66 = vperm.slane %v31, 1
    %v71 = vunpack.c.l.b16 %v62
    %v72 = vunpack.c.l.b16 %v63
    %v73 = vunpack.c.l.b16 %v64
    %v74 = vunpack.c.l.b16 %v65
    %v75 = vpack.c.b16 %v72, %v71
    %v76 = vpack.c.b16 %v74, %v73
    %vm79 = vcmask 261120
    %v81 = vsel %vm79, %v61, 0
    %83 = vmatpush.bf16.msra.mxu0 0
    %84 = vmatpush.bf16.msra.mxu0 0
    %85 = vmatpush.bf16.msra.mxu0 0
    %86 = vmatpush.bf16.msra.mxu0 0
    %87 = vmatpush.bf16.msra.mxu0 0
    %88 = vmatpush.bf16.msra.mxu0 0
    %89 = vmatpush.bf16.msra.mxu0 %v76
    %90 = vmatpush.bf16.msra.mxu0 %v75
    %91 = vmatmul.bf16.gmra.mxu0 %v81
    %v92 = vpop.f32.mrf.mxu0
    %v93 = vadd.f32 %v66, %v92
    %v94 = vpop.f32.mrf.mxu0
    %v95 = vadd.f32 %v66, %v94
    %96 = vdwg.mxu0
    %v97 = vtanh.pop %v93
    %v98 = vtanh.pop %v95
    %v99 = vpack.c.bf16 %v98, %v97
    %v100 = vld [vmem:[#allocation2 + $0x18] sm:$0x3]
    %v101 = vperm.slane %v31, 2
    %v103 = vsel %vm37, %v99, 0
    %v106 = vsel %vm41, %v100, 0
    %108 = vmatpush.bf16.msra.mxu0 0
    %109 = vmatpush.bf16.msra.mxu0 0
    %110 = vmatpush.bf16.msra.mxu0 0
    %111 = vmatpush.bf16.msra.mxu0 0
    %112 = vmatpush.bf16.msra.mxu0 0
    %113 = vmatpush.bf16.msra.mxu0 0
    %114 = vmatpush.bf16.msra.mxu0 0
    %115 = vmatpush.bf16.msra.mxu0 %v106
    %116 = vmatmul.bf16.gmra.mxu0 %v103
    %v117 = vpop.f32.mrf.mxu0
    %v118 = vadd.f32 %v101, %v117
    %v119 = vpop.f32.mrf.mxu0
    %v120 = vadd.f32 %v101, %v119
    %121 = vdwg.mxu0
    %v122 = vld [vmem:[#allocation2 + $0x20] sm:$0xf]
    %v123 = vld [vmem:[#allocation2 + $0x24] sm:$0xf]
    %v124 = vld [vmem:[#allocation2 + $0x28] sm:$0xf]
    %v125 = vld [vmem:[#allocation2 + $0x2c] sm:$0xf]
    %v130 = vunpack.c.l.b16 %v122
    %v131 = vunpack.c.l.b16 %v123
    %v132 = vunpack.c.l.b16 %v124
    %v133 = vunpack.c.l.b16 %v125
    %v134 = vpack.c.b16 %v131, %v130
    %v135 = vpack.c.b16 %v133, %v132
    %v139 = vsel %vm79, 0, 0
    %141 = vmatpush.bf16.msra.mxu0 0
    %142 = vmatpush.bf16.msra.mxu0 0
    %143 = vmatpush.bf16.msra.mxu0 0
    %144 = vmatpush.bf16.msra.mxu0 0
    %145 = vmatpush.bf16.msra.mxu0 0
    %146 = vmatpush.bf16.msra.mxu0 0
    %147 = vmatpush.bf16.msra.mxu0 %v135
    %148 = vmatpush.bf16.msra.mxu0 %v134
    %149 = vmatmul.bf16.gmra.mxu0 %v139
    %v150 = vpop.f32.mrf.mxu0
    %v151 = vadd.f32 0.0, %v150
    %v152 = vpop.f32.mrf.mxu0
    %153 = vdwg.mxu0
    %v154 = vadd.f32 %v118, %v151
    %v155 = vxor.u32 %v154, 2147483648
    %v156 = vmul.f32 %v155, 1.442695
    %v157 = vpow.pop %v156
    %v158 = vadd.f32 %v157, 1.0
    %v159 = vrcp.pop %v158
    %v160 = vmul.f32 %v158, %v159
    %v161 = vsub.f32 1.0, %v160
    %v162 = vmul.f32 %v159, %v161
    %v163 = vadd.f32 %v159, %v162
    %vm164 = vweird.f32 %v158
    %vm165 = vweird.f32 %v159
    %vm166 = vmor %vm164, %vm165
    %v167 = vsel %vm166, %v159, %v163
    %v168 = vand.u32 2147483647, %v158
    %vm169 = vcmp.eq.f32.partialorder %v168, 8.507059e+37
    %v170 = vand.u32 %v158, 2147483648
    %v171 = vor.u32 1.1754944e-38, %v170
    %v172 = vsel %vm169, %v171, %v167
    %v173 = vmul.f32 1.0, %v172
    %v174 = vtanh.pop %v154
    %v175 = vmul.f32 %v173, 0.0
    %177 = vrot.lane.b32.xlu0 %v174, 64
    %v178 = vpop.permute.xlu0 %177
    %v180 = vmul.f32 %v173, %v178
    %182 = vrot.lane.b32.xlu0 %v180, 32
    %v183 = vpop.permute.xlu0 %182
    %v185 = vadd.f32 %v175, %v183
    %v186 = vtanh.pop %v185
    %188 = vrot.lane.b32.xlu0 %v186, 64
    %v189 = vpop.permute.xlu0 %188
    %v191 = vmul.f32 %v173, %v189
    %v192 = vpack.c.bf16 %v191, %v191
    %194 = vrot.lane.b32.xlu0 %v192, 32
    %v195 = vpop.permute.xlu0 %194
    %v197 = vsel %vm79, %v195, 0
    %199 = vmatpush.bf16.msra.mxu0 0
    %200 = vmatpush.bf16.msra.mxu0 0
    %201 = vmatpush.bf16.msra.mxu0 0
    %202 = vmatpush.bf16.msra.mxu0 0
    %203 = vmatpush.bf16.msra.mxu0 0
    %204 = vmatpush.bf16.msra.mxu0 0
    %205 = vmatpush.bf16.msra.mxu0 %v135
    %206 = vmatpush.bf16.msra.mxu0 %v134
    %207 = vmatmul.bf16.gmra.mxu0 %v197
    %v208 = vpop.f32.mrf.mxu0
    %v209 = vadd.f32 0.0, %v208
    %v210 = vpop.f32.mrf.mxu0
    %211 = vdwg.mxu0
    %v213 = vrot.slane %v209, 6
    %v215 = vadd.f32 %v118, %v213
    %v216 = vxor.u32 %v215, 2147483648
    %v217 = vmul.f32 %v216, 1.442695
    %v218 = vpow.pop %v217
    %v219 = vadd.f32 %v218, 1.0
    %v220 = vrcp.pop %v219
    %v221 = vmul.f32 %v219, %v220
    %v222 = vsub.f32 1.0, %v221
    %v223 = vmul.f32 %v220, %v222
    %v224 = vadd.f32 %v220, %v223
    %vm225 = vweird.f32 %v219
    %vm226 = vweird.f32 %v220
    %vm227 = vmor %vm225, %vm226
    %v228 = vsel %vm227, %v220, %v224
    %v229 = vand.u32 2147483647, %v219
    %vm230 = vcmp.eq.f32.partialorder %v229, 8.507059e+37
    %v231 = vand.u32 %v219, 2147483648
    %v232 = vor.u32 1.1754944e-38, %v231
    %v233 = vsel %vm230, %v232, %v228
    %v234 = vmul.f32 1.0, %v233
    %v235 = vtanh.pop %v215
    %v237 = vrot.slane %v185, 6
    %v239 = vmul.f32 %v234, %v237
    %241 = vrot.lane.b32.xlu0 %v235, 64
    %v242 = vpop.permute.xlu0 %241
    %v244 = vmul.f32 %v234, %v242
    %246 = vrot.lane.b32.xlu0 %v244, 32
    %v247 = vpop.permute.xlu0 %246
    %v249 = vadd.f32 %v239, %v247
    %v250 = vtanh.pop %v249
    %252 = vrot.lane.b32.xlu0 %v250, 64
    %v253 = vpop.permute.xlu0 %252
    %v255 = vmul.f32 %v234, %v253
    %v256 = vpack.c.bf16 %v255, %v255
    %v258 = vrot.slane %v256, 1
    %259 = vrot.lane.b32.xlu0 %v258, 32
    %v260 = vpop.permute.xlu0 %259
    %v262 = vsel %vm79, %v260, 0
    %264 = vmatpush.bf16.msra.mxu0 0
    %265 = vmatpush.bf16.msra.mxu0 0
    %266 = vmatpush.bf16.msra.mxu0 0
    %267 = vmatpush.bf16.msra.mxu0 0
    %268 = vmatpush.bf16.msra.mxu0 0
    %269 = vmatpush.bf16.msra.mxu0 0
    %270 = vmatpush.bf16.msra.mxu0 %v135
    %271 = vmatpush.bf16.msra.mxu0 %v134
    %272 = vmatmul.bf16.gmra.mxu0 %v262
    %v273 = vpop.f32.mrf.mxu0
    %v274 = vadd.f32 0.0, %v273
    %v275 = vpop.f32.mrf.mxu0
    %276 = vdwg.mxu0
    %v278 = vrot.slane %v274, 4
    %v280 = vadd.f32 %v118, %v278
    %v281 = vxor.u32 %v280, 2147483648
    %v282 = vmul.f32 %v281, 1.442695
    %v283 = vpow.pop %v282
    %v284 = vadd.f32 %v283, 1.0
    %v285 = vrcp.pop %v284
    %v286 = vmul.f32 %v284, %v285
    %v287 = vsub.f32 1.0, %v286
    %v288 = vmul.f32 %v285, %v287
    %v289 = vadd.f32 %v285, %v288
    %vm290 = vweird.f32 %v284
    %vm291 = vweird.f32 %v285
    %vm292 = vmor %vm290, %vm291
    %v293 = vsel %vm292, %v285, %v289
    %v294 = vand.u32 2147483647, %v284
    %vm295 = vcmp.eq.f32.partialorder %v294, 8.507059e+37
    %v296 = vand.u32 %v284, 2147483648
    %v297 = vor.u32 1.1754944e-38, %v296
    %v298 = vsel %vm295, %v297, %v293
    %v299 = vmul.f32 1.0, %v298
    %v300 = vtanh.pop %v280
    %v302 = vrot.slane %v249, 6
    %v304 = vmul.f32 %v299, %v302
    %306 = vrot.lane.b32.xlu0 %v300, 64
    %v307 = vpop.permute.xlu0 %306
    %v309 = vmul.f32 %v299, %v307
    %311 = vrot.lane.b32.xlu0 %v309, 32
    %v312 = vpop.permute.xlu0 %311
    %v314 = vadd.f32 %v304, %v312
    %v315 = vtanh.pop %v314
    %317 = vrot.lane.b32.xlu0 %v315, 64
    %v318 = vpop.permute.xlu0 %317
    %v320 = vmul.f32 %v299, %v318
    %v321 = vpack.c.bf16 %v320, %v320
    %v323 = vrot.slane %v321, 2
    %324 = vrot.lane.b32.xlu0 %v323, 32
    %v325 = vpop.permute.xlu0 %324
    %v327 = vsel %vm79, %v325, 0
    %329 = vmatpush.bf16.msra.mxu0 0
    %330 = vmatpush.bf16.msra.mxu0 0
    %331 = vmatpush.bf16.msra.mxu0 0
    %332 = vmatpush.bf16.msra.mxu0 0
    %333 = vmatpush.bf16.msra.mxu0 0
    %334 = vmatpush.bf16.msra.mxu0 0
    %335 = vmatpush.bf16.msra.mxu0 %v135
    %336 = vmatpush.bf16.msra.mxu0 %v134
    %337 = vmatmul.bf16.gmra.mxu0 %v327
    %v338 = vpop.f32.mrf.mxu0
    %v339 = vadd.f32 0.0, %v338
    %v340 = vpop.f32.mrf.mxu0
    %341 = vdwg.mxu0
    %v343 = vrot.slane %v339, 2
    %v345 = vadd.f32 %v118, %v343
    %v346 = vxor.u32 %v345, 2147483648
    %v347 = vmul.f32 %v346, 1.442695
    %v348 = vpow.pop %v347
    %v349 = vadd.f32 %v348, 1.0
    %v350 = vrcp.pop %v349
    %v351 = vmul.f32 %v349, %v350
    %v352 = vsub.f32 1.0, %v351
    %v353 = vmul.f32 %v350, %v352
    %v354 = vadd.f32 %v350, %v353
    %vm355 = vweird.f32 %v349
    %vm356 = vweird.f32 %v350
    %vm357 = vmor %vm355, %vm356
    %v358 = vsel %vm357, %v350, %v354
    %v359 = vand.u32 2147483647, %v349
    %vm360 = vcmp.eq.f32.partialorder %v359, 8.507059e+37
    %v361 = vand.u32 %v349, 2147483648
    %v362 = vor.u32 1.1754944e-38, %v361
    %v363 = vsel %vm360, %v362, %v358
    %v364 = vmul.f32 1.0, %v363
    %v365 = vtanh.pop %v345
    %v367 = vrot.slane %v314, 6
    %v369 = vmul.f32 %v364, %v367
    %371 = vrot.lane.b32.xlu0 %v365, 64
    %v372 = vpop.permute.xlu0 %371
    %v374 = vmul.f32 %v364, %v372
    %376 = vrot.lane.b32.xlu0 %v374, 32
    %v377 = vpop.permute.xlu0 %376
    %v379 = vadd.f32 %v369, %v377
    %v380 = vtanh.pop %v379
    %382 = vrot.lane.b32.xlu0 %v380, 64
    %v383 = vpop.permute.xlu0 %382
    %v385 = vmul.f32 %v364, %v383
    %v386 = vpack.c.bf16 %v385, %v385
    %v388 = vrot.slane %v386, 3
    %389 = vrot.lane.b32.xlu0 %v388, 32
    %v390 = vpop.permute.xlu0 %389
    %v392 = vsel %vm79, %v390, 0
    %394 = vmatpush.bf16.msra.mxu0 0
    %395 = vmatpush.bf16.msra.mxu0 0
    %396 = vmatpush.bf16.msra.mxu0 0
    %397 = vmatpush.bf16.msra.mxu0 0
    %398 = vmatpush.bf16.msra.mxu0 0
    %399 = vmatpush.bf16.msra.mxu0 0
    %400 = vmatpush.bf16.msra.mxu0 %v135
    %401 = vmatpush.bf16.msra.mxu0 %v134
    %402 = vmatmul.bf16.gmra.mxu0 %v392
    %v403 = vpop.f32.mrf.mxu0
    %v404 = vadd.f32 0.0, %v403
    %v405 = vpop.f32.mrf.mxu0
    %406 = vdwg.mxu0
    %v407 = vadd.f32 %v120, %v404
    %v408 = vxor.u32 %v407, 2147483648
    %v409 = vmul.f32 %v408, 1.442695
    %v410 = vpow.pop %v409
    %v411 = vadd.f32 %v410, 1.0
    %v412 = vrcp.pop %v411
    %v413 = vmul.f32 %v411, %v412
    %v414 = vsub.f32 1.0, %v413
    %v415 = vmul.f32 %v412, %v414
    %v416 = vadd.f32 %v412, %v415
    %vm417 = vweird.f32 %v411
    %vm418 = vweird.f32 %v412
    %vm419 = vmor %vm417, %vm418
    %v420 = vsel %vm419, %v412, %v416
    %v421 = vand.u32 2147483647, %v411
    %vm422 = vcmp.eq.f32.partialorder %v421, 8.507059e+37
    %v423 = vand.u32 %v411, 2147483648
    %v424 = vor.u32 1.1754944e-38, %v423
    %v425 = vsel %vm422, %v424, %v420
    %v426 = vmul.f32 1.0, %v425
    %v427 = vtanh.pop %v407
    %v429 = vrot.slane %v379, 6
    %v431 = vmul.f32 %v426, %v429
    %433 = vrot.lane.b32.xlu0 %v427, 64
    %v434 = vpop.permute.xlu0 %433
    %v436 = vmul.f32 %v426, %v434
    %438 = vrot.lane.b32.xlu0 %v436, 32
    %v439 = vpop.permute.xlu0 %438
    %v441 = vadd.f32 %v431, %v439
    %v442 = vtanh.pop %v441
    %444 = vrot.lane.b32.xlu0 %v442, 64
    %v445 = vpop.permute.xlu0 %444
    %v447 = vmul.f32 %v426, %v445
    %v448 = vpack.c.bf16 %v447, %v447
    %450 = vrot.lane.b32.xlu0 %v448, 32
    %v451 = vpop.permute.xlu0 %450
    %v453 = vsel %vm79, %v451, 0
    %455 = vmatpush.bf16.msra.mxu0 0
    %456 = vmatpush.bf16.msra.mxu0 0
    %457 = vmatpush.bf16.msra.mxu0 0
    %458 = vmatpush.bf16.msra.mxu0 0
    %459 = vmatpush.bf16.msra.mxu0 0
    %460 = vmatpush.bf16.msra.mxu0 0
    %461 = vmatpush.bf16.msra.mxu0 %v135
    %462 = vmatpush.bf16.msra.mxu0 %v134
    %463 = vmatmul.bf16.gmra.mxu0 %v453
    %v464 = vpop.f32.mrf.mxu0
    %v465 = vadd.f32 0.0, %v464
    %v466 = vpop.f32.mrf.mxu0
    %467 = vdwg.mxu0
    %v469 = vrot.slane %v465, 6
    %v471 = vadd.f32 %v120, %v469
    %v472 = vxor.u32 %v471, 2147483648
    %v473 = vmul.f32 %v472, 1.442695
    %v474 = vpow.pop %v473
    %v475 = vadd.f32 %v474, 1.0
    %v476 = vrcp.pop %v475
    %v477 = vmul.f32 %v475, %v476
    %v478 = vsub.f32 1.0, %v477
    %v479 = vmul.f32 %v476, %v478
    %v480 = vadd.f32 %v476, %v479
    %vm481 = vweird.f32 %v475
    %vm482 = vweird.f32 %v476
    %vm483 = vmor %vm481, %vm482
    %v484 = vsel %vm483, %v476, %v480
    %v485 = vand.u32 2147483647, %v475
    %vm486 = vcmp.eq.f32.partialorder %v485, 8.507059e+37
    %v487 = vand.u32 %v475, 2147483648
    %v488 = vor.u32 1.1754944e-38, %v487
    %v489 = vsel %vm486, %v488, %v484
    %v490 = vmul.f32 1.0, %v489
    %v491 = vtanh.pop %v471
    %v493 = vrot.slane %v441, 6
    %v495 = vmul.f32 %v490, %v493
    %497 = vrot.lane.b32.xlu0 %v491, 64
    %v498 = vpop.permute.xlu0 %497
    %v500 = vmul.f32 %v490, %v498
    %502 = vrot.lane.b32.xlu0 %v500, 32
    %v503 = vpop.permute.xlu0 %502
    %v505 = vadd.f32 %v495, %v503
    %v506 = vtanh.pop %v505
    %508 = vrot.lane.b32.xlu0 %v506, 64
    %v509 = vpop.permute.xlu0 %508
    %v511 = vmul.f32 %v490, %v509
    %v512 = vpack.c.bf16 %v511, %v511
    %v514 = vrot.slane %v512, 1
    %515 = vrot.lane.b32.xlu0 %v514, 32
    %v516 = vpop.permute.xlu0 %515
    %v518 = vsel %vm79, %v516, 0
    %520 = vmatpush.bf16.msra.mxu0 0
    %521 = vmatpush.bf16.msra.mxu0 0
    %522 = vmatpush.bf16.msra.mxu0 0
    %523 = vmatpush.bf16.msra.mxu0 0
    %524 = vmatpush.bf16.msra.mxu0 0
    %525 = vmatpush.bf16.msra.mxu0 0
    %526 = vmatpush.bf16.msra.mxu0 %v135
    %527 = vmatpush.bf16.msra.mxu0 %v134
    %528 = vmatmul.bf16.gmra.mxu0 %v518
    %v529 = vpop.f32.mrf.mxu0
    %v530 = vadd.f32 0.0, %v529
    %v531 = vpop.f32.mrf.mxu0
    %532 = vdwg.mxu0
    %v534 = vrot.slane %v530, 4
    %v536 = vadd.f32 %v120, %v534
    %v537 = vxor.u32 %v536, 2147483648
    %v538 = vmul.f32 %v537, 1.442695
    %v539 = vpow.pop %v538
    %v540 = vadd.f32 %v539, 1.0
    %v541 = vrcp.pop %v540
    %v542 = vmul.f32 %v540, %v541
    %v543 = vsub.f32 1.0, %v542
    %v544 = vmul.f32 %v541, %v543
    %v545 = vadd.f32 %v541, %v544
    %vm546 = vweird.f32 %v540
    %vm547 = vweird.f32 %v541
    %vm548 = vmor %vm546, %vm547
    %v549 = vsel %vm548, %v541, %v545
    %v550 = vand.u32 2147483647, %v540
    %vm551 = vcmp.eq.f32.partialorder %v550, 8.507059e+37
    %v552 = vand.u32 %v540, 2147483648
    %v553 = vor.u32 1.1754944e-38, %v552
    %v554 = vsel %vm551, %v553, %v549
    %v555 = vmul.f32 1.0, %v554
    %v556 = vtanh.pop %v536
    %v558 = vrot.slane %v505, 6
    %v560 = vmul.f32 %v555, %v558
    %562 = vrot.lane.b32.xlu0 %v556, 64
    %v563 = vpop.permute.xlu0 %562
    %v565 = vmul.f32 %v555, %v563
    %567 = vrot.lane.b32.xlu0 %v565, 32
    %v568 = vpop.permute.xlu0 %567
    %v570 = vadd.f32 %v560, %v568
    %v571 = vtanh.pop %v570
    %573 = vrot.lane.b32.xlu0 %v571, 64
    %v574 = vpop.permute.xlu0 %573
    %v576 = vmul.f32 %v555, %v574
    %v577 = vpack.c.bf16 %v576, %v576
    %v579 = vrot.slane %v577, 2
    %580 = vrot.lane.b32.xlu0 %v579, 32
    %v581 = vpop.permute.xlu0 %580
    %v583 = vsel %vm79, %v581, 0
    %585 = vmatpush.bf16.msra.mxu0 0
    %586 = vmatpush.bf16.msra.mxu0 0
    %587 = vmatpush.bf16.msra.mxu0 0
    %588 = vmatpush.bf16.msra.mxu0 0
    %589 = vmatpush.bf16.msra.mxu0 0
    %590 = vmatpush.bf16.msra.mxu0 0
    %591 = vmatpush.bf16.msra.mxu0 %v135
    %592 = vmatpush.bf16.msra.mxu0 %v134
    %593 = vmatmul.bf16.gmra.mxu0 %v583
    %v594 = vpop.f32.mrf.mxu0
    %v595 = vadd.f32 0.0, %v594
    %v596 = vpop.f32.mrf.mxu0
    %597 = vdwg.mxu0
    %v599 = vrot.slane %v595, 2
    %v601 = vadd.f32 %v120, %v599
    %v602 = vxor.u32 %v601, 2147483648
    %v603 = vmul.f32 %v602, 1.442695
    %v604 = vpow.pop %v603
    %v605 = vadd.f32 %v604, 1.0
    %v606 = vrcp.pop %v605
    %v607 = vmul.f32 %v605, %v606
    %v608 = vsub.f32 1.0, %v607
    %v609 = vmul.f32 %v606, %v608
    %v610 = vadd.f32 %v606, %v609
    %vm611 = vweird.f32 %v605
    %vm612 = vweird.f32 %v606
    %vm613 = vmor %vm611, %vm612
    %v614 = vsel %vm613, %v606, %v610
    %v615 = vand.u32 2147483647, %v605
    %vm616 = vcmp.eq.f32.partialorder %v615, 8.507059e+37
    %v617 = vand.u32 %v605, 2147483648
    %v618 = vor.u32 1.1754944e-38, %v617
    %v619 = vsel %vm616, %v618, %v614
    %v620 = vmul.f32 1.0, %v619
    %v621 = vtanh.pop %v601
    %v623 = vrot.slane %v570, 6
    %v625 = vmul.f32 %v620, %v623
    %627 = vrot.lane.b32.xlu0 %v621, 64
    %v628 = vpop.permute.xlu0 %627
    %v630 = vmul.f32 %v620, %v628
    %632 = vrot.lane.b32.xlu0 %v630, 32
    %v633 = vpop.permute.xlu0 %632
    %v635 = vadd.f32 %v625, %v633
    %v636 = vtanh.pop %v635
    %638 = vrot.lane.b32.xlu0 %v636, 64
    %v639 = vpop.permute.xlu0 %638
    %v641 = vmul.f32 %v620, %v639
    %v642 = vsel %vm41, %v191, %v255
    %vm643 = vcmask 1043456
    %v644 = vsel %vm643, %v642, %v320
    %vm645 = vcmask 1045504
    %v646 = vsel %vm645, %v644, %v385
    %v647 = vsel %vm41, %v447, %v511
    %v648 = vsel %vm643, %v647, %v576
    %v649 = vsel %vm645, %v648, %v641
    %v650 = vpack.c.bf16 %v649, %v646
    %v651 = vld [vmem:[#allocation2 + $0x30] sm:$0xf]
    %v652 = vld [vmem:[#allocation2 + $0x34] sm:$0xf]
    %v653 = vld [vmem:[#allocation2 + $0x38] sm:$0xf]
    %v654 = vld [vmem:[#allocation2 + $0x3c] sm:$0xf]
    %v655 = vperm.slane %v31, 3
    %657 = vrot.lane.b32.xlu0 %v650, 32
    %v658 = vpop.permute.xlu0 %657
    %v663 = vunpack.c.l.b16 %v651
    %v664 = vunpack.c.l.b16 %v652
    %v665 = vunpack.c.l.b16 %v653
    %v666 = vunpack.c.l.b16 %v654
    %v667 = vpack.c.b16 %v664, %v663
    %v668 = vpack.c.b16 %v666, %v665
    %v672 = vsel %vm79, %v658, 0
    %674 = vmatpush.bf16.msra.mxu0 0
    %675 = vmatpush.bf16.msra.mxu0 0
    %676 = vmatpush.bf16.msra.mxu0 0
    %677 = vmatpush.bf16.msra.mxu0 0
    %678 = vmatpush.bf16.msra.mxu0 0
    %679 = vmatpush.bf16.msra.mxu0 0
    %680 = vmatpush.bf16.msra.mxu0 %v668
    %681 = vmatpush.bf16.msra.mxu0 %v667
    %682 = vmatmul.bf16.gmra.mxu0 %v672
    %v683 = vpop.f32.mrf.mxu0
    %v684 = vadd.f32 %v655, %v683
    %v685 = vpop.f32.mrf.mxu0
    %v686 = vadd.f32 %v655, %v685
    %687 = vdwg.mxu0
    %v688 = vtanh.pop %v684
    %v689 = vtanh.pop %v686
    %v690 = vpack.c.bf16 %v689, %v688
    %v691 = vld [vmem:[#allocation2 + $0x40] sm:$0xf]
    %v692 = vld [vmem:[#allocation2 + $0x44] sm:$0xf]
    %v693 = vld [vmem:[#allocation2 + $0x48] sm:$0xf]
    %v694 = vld [vmem:[#allocation2 + $0x4c] sm:$0xf]
    %v695 = vperm.slane %v31, 4
    %v700 = vunpack.c.l.b16 %v691
    %v701 = vunpack.c.l.b16 %v692
    %v702 = vunpack.c.l.b16 %v693
    %v703 = vunpack.c.l.b16 %v694
    %v704 = vpack.c.b16 %v701, %v700
    %v705 = vpack.c.b16 %v703, %v702
    %v709 = vsel %vm79, %v690, 0
    %711 = vmatpush.bf16.msra.mxu0 0
    %712 = vmatpush.bf16.msra.mxu0 0
    %713 = vmatpush.bf16.msra.mxu0 0
    %714 = vmatpush.bf16.msra.mxu0 0
    %715 = vmatpush.bf16.msra.mxu0 0
    %716 = vmatpush.bf16.msra.mxu0 0
    %717 = vmatpush.bf16.msra.mxu0 %v705
    %718 = vmatpush.bf16.msra.mxu0 %v704
    %719 = vmatmul.bf16.gmra.mxu0 %v709
    %v720 = vpop.f32.mrf.mxu0
    %v721 = vadd.f32 %v695, %v720
    %v722 = vpop.f32.mrf.mxu0
    %v723 = vadd.f32 %v695, %v722
    %724 = vdwg.mxu0
    %v725 = vtanh.pop %v721
    %v726 = vtanh.pop %v723
    %v727 = vpack.c.bf16 %v726, %v725
    %v728 = vld [vmem:[#allocation2 + $0x50] sm:$0xf]
    %v729 = vld [vmem:[#allocation2 + $0x54] sm:$0xf]
    %v730 = vld [vmem:[#allocation2 + $0x58] sm:$0xf]
    %v731 = vld [vmem:[#allocation2 + $0x5c] sm:$0xf]
    %v732 = vperm.slane %v31, 5
    %v737 = vunpack.c.l.b16 %v728
    %v738 = vunpack.c.l.b16 %v729
    %v739 = vunpack.c.l.b16 %v730
    %v740 = vunpack.c.l.b16 %v731
    %v741 = vpack.c.b16 %v738, %v737
    %v742 = vpack.c.b16 %v740, %v739
    %v746 = vsel %vm79, %v727, 0
    %748 = vmatpush.bf16.msra.mxu0 0
    %749 = vmatpush.bf16.msra.mxu0 0
    %750 = vmatpush.bf16.msra.mxu0 0
    %751 = vmatpush.bf16.msra.mxu0 0
    %752 = vmatpush.bf16.msra.mxu0 0
    %753 = vmatpush.bf16.msra.mxu0 0
    %754 = vmatpush.bf16.msra.mxu0 %v742
    %755 = vmatpush.bf16.msra.mxu0 %v741
    %756 = vmatmul.bf16.gmra.mxu0 %v746
    %v757 = vpop.f32.mrf.mxu0
    %v758 = vadd.f32 %v732, %v757
    %v759 = vpop.f32.mrf.mxu0
    %v760 = vadd.f32 %v732, %v759
    %761 = vdwg.mxu0
    %v762 = vtanh.pop %v758
    %v763 = vtanh.pop %v760
    %v764 = vpack.c.bf16 %v763, %v762
    %v765 = vld [vmem:[#allocation2 + $0x60] sm:$0xf]
    %v766 = vld [vmem:[#allocation2 + $0x64] sm:$0xf]
    %v767 = vld [vmem:[#allocation2 + $0x68] sm:$0xf]
    %v768 = vld [vmem:[#allocation2 + $0x6c] sm:$0xf]
    %v769 = vperm.slane %v31, 6
    %v774 = vunpack.c.l.b16 %v765
    %v775 = vunpack.c.l.b16 %v766
    %v776 = vunpack.c.l.b16 %v767
    %v777 = vunpack.c.l.b16 %v768
    %v778 = vpack.c.b16 %v775, %v774
    %v779 = vpack.c.b16 %v777, %v776
    %v783 = vsel %vm79, %v764, 0
    %785 = vmatpush.bf16.msra.mxu0 0
    %786 = vmatpush.bf16.msra.mxu0 0
    %787 = vmatpush.bf16.msra.mxu0 0
    %788 = vmatpush.bf16.msra.mxu0 0
    %789 = vmatpush.bf16.msra.mxu0 0
    %790 = vmatpush.bf16.msra.mxu0 0
    %791 = vmatpush.bf16.msra.mxu0 %v779
    %792 = vmatpush.bf16.msra.mxu0 %v778
    %793 = vmatmul.bf16.gmra.mxu0 %v783
    %v794 = vpop.f32.mrf.mxu0
    %v795 = vadd.f32 %v769, %v794
    %v796 = vpop.f32.mrf.mxu0
    %v797 = vadd.f32 %v769, %v796
    %798 = vdwg.mxu0
    %v799 = vtanh.pop %v795
    %v800 = vtanh.pop %v797
    %v801 = vpack.c.bf16 %v800, %v799
    %v802 = vld [vmem:[#allocation2 + $0x70] sm:$0xf]
    %v803 = vld [vmem:[#allocation2 + $0x74] sm:$0xf]
    %v804 = vld [vmem:[#allocation2 + $0x78] sm:$0xf]
    %v805 = vld [vmem:[#allocation2 + $0x7c] sm:$0xf]
    %v806 = vperm.slane %v31, 7
    %v811 = vunpack.c.l.b16 %v802
    %v812 = vunpack.c.l.b16 %v803
    %v813 = vunpack.c.l.b16 %v804
    %v814 = vunpack.c.l.b16 %v805
    %v815 = vpack.c.b16 %v812, %v811
    %v816 = vpack.c.b16 %v814, %v813
    %v820 = vsel %vm79, %v801, 0
    %822 = vmatpush.bf16.msra.mxu0 0
    %823 = vmatpush.bf16.msra.mxu0 0
    %824 = vmatpush.bf16.msra.mxu0 0
    %825 = vmatpush.bf16.msra.mxu0 0
    %826 = vmatpush.bf16.msra.mxu0 0
    %827 = vmatpush.bf16.msra.mxu0 0
    %828 = vmatpush.bf16.msra.mxu0 %v816
    %829 = vmatpush.bf16.msra.mxu0 %v815
    %830 = vmatmul.bf16.gmra.mxu0 %v820
    %v831 = vpop.f32.mrf.mxu0
    %v832 = vadd.f32 %v806, %v831
    %v833 = vpop.f32.mrf.mxu0
    %v834 = vadd.f32 %v806, %v833
    %835 = vdwg.mxu0
    %836 = vst.msk [vmem:[%s3] sm:$0xff] %vm37, %v832
    %837 = vst.msk [vmem:[%s3 + $0x8] sm:$0xff] %vm37, %v834
    // Predicated region
    $region18: #{lstm_forward.1} parent=1 // pred_check
      _
    $region19: #{lstm_forward.1} parent=1 // pred_check_branch
      %839 = sbr.rel (0) target = $region21
    $region20: #{lstm_forward.1} parent=1 // pred_region
      _
    $region21: #{lstm_forward.1} parent=1 // pred_fallthru
      _
    // Predicated region
    $region22: #{lstm_forward.1} parent=1 // pred_check
      _
    $region23: #{lstm_forward.1} parent=1 // pred_check_branch
      %841 = sbr.rel (0) target = $region25
    $region24: #{lstm_forward.1} parent=1 // pred_region
      _
    $region25: #{lstm_forward.1} parent=1 // pred_fallthru
      _
    %842 = vsyncpa [#allocation3], 1

</llo_original>
